<compile_context>
chip_gen: v7x
topology: tpu7x:2x2x1
jax: 0.10.0
libtpu: 0.0.40
codegen_flags: <defaults>
</compile_context>

<pallas_src>
import jax
import jax.numpy as jnp
from jax.experimental import pallas as pl
from jax.experimental.pallas import tpu as pltpu

INPUT_DIM = 20
HIDDEN_DIM = 128
LN_EPS = 1e-5
MAX_BATCH_TILE = 2048  # rows; ~3 MiB f32 per output buffer -> pipelined footprint is small


def _round_up(n, m):
    return -(-n // m) * m


def _layernorm(h, gamma, beta):
    # One-pass LN: mu = sum/N, var = sumsq/N - mu^2. Two XLU reductions, no extra
    # full-tile VPU subtract pass; rsqrt lands on the EUP slot (free).
    inv_n = jnp.float32(1.0 / HIDDEN_DIM)
    s = jnp.sum(h, axis=-1, keepdims=True)
    sq = jnp.sum(h * h, axis=-1, keepdims=True)
    mu = s * inv_n
    var = jnp.maximum(sq * inv_n - mu * mu, 0.0)  # clamp: cancellation can go < 0
    return (h - mu) * jax.lax.rsqrt(var + LN_EPS) * gamma + beta


def mlp_branch_kernel(x_ref, w1_ref, b1_ref, g1_ref, be1_ref,
                      w2_ref, b2_ref, g2_ref, be2_ref, o_ref):
    mm_dtype = w1_ref.dtype  # bf16 when bf16_matmul=True, else f32

    # Layer 1: Linear(input_dim -> hidden) + LayerNorm + ReLU (+ Dropout=identity)
    x = x_ref[...].astype(mm_dtype)
    h = jnp.dot(x, w1_ref[...], preferred_element_type=jnp.float32) + b1_ref[...]
    h = _layernorm(h, g1_ref[...], be1_ref[...])
    h = jnp.maximum(h, 0.0)

    # Layer 2: Linear(hidden -> hidden) + LayerNorm + ReLU (+ Dropout=identity)
    h = jnp.dot(h.astype(mm_dtype), w2_ref[...],
                preferred_element_type=jnp.float32) + b2_ref[...]
    h = _layernorm(h, g2_ref[...], be2_ref[...])
    h = jnp.maximum(h, 0.0)

    o_ref[...] = h.astype(o_ref.dtype)


def mlp_branch(x, params, *, batch_tile=None, out_dtype=None, bf16_matmul=True):
    B, D = x.shape
    assert D == INPUT_DIM
    if out_dtype is None:
        out_dtype = x.dtype  # pass out_dtype=jnp.bfloat16 to halve store traffic

    w1, b1, g1, be1, w2, b2, g2, be2 = params
    mm_dtype = jnp.bfloat16 if bf16_matmul else w1.dtype
    w1c = w1.astype(mm_dtype)
    w2c = w2.astype(mm_dtype)

    # Tile selection:
    #   * huge batches: 2048-row tiles (amortize per-step overhead, pipelined)
    #   * mid batches (>=512): split into 2 tiles so grid >= 2 and the "parallel"
    #     axis can shard across v7x's two TensorCores
    #   * small batches: single sublane-aligned tile
    if batch_tile is None:
        if B > MAX_BATCH_TILE:
            batch_tile = MAX_BATCH_TILE
        elif B >= 512:
            batch_tile = _round_up((B + 1) // 2, 8)
        else:
            batch_tile = _round_up(B, 8)
    assert batch_tile % 8 == 0, "batch_tile must be a multiple of 8 (f32 sublane)"

    # No wrapper-side padding: Pallas masks the partial trailing block (rows are
    # independent, so the padded tail of the last input block cannot corrupt
    # valid output rows), and OOB output rows are never written.
    grid = pl.cdiv(B, batch_tile)

    # Replicated parameter blocks (full arrays; block index constant across the
    # grid, so Pallas keeps them resident in VMEM instead of re-fetching).
    rep = lambda shape: pl.BlockSpec(shape, lambda i: (0, 0))

    return pl.pallas_call(
        mlp_branch_kernel,
        out_shape=jax.ShapeDtypeStruct((B, HIDDEN_DIM), out_dtype),
        grid_spec=pltpu.PrefetchScalarGridSpec(
            num_scalar_prefetch=0,
            grid=(grid,),
            in_specs=[
                pl.BlockSpec((batch_tile, INPUT_DIM), lambda i: (i, 0)),  # x tile
                rep((INPUT_DIM, HIDDEN_DIM)),                             # W1 (bf16)
                rep((1, HIDDEN_DIM)),                                     # b1
                rep((1, HIDDEN_DIM)),                                     # gamma1
                rep((1, HIDDEN_DIM)),                                     # beta1
                rep((HIDDEN_DIM, HIDDEN_DIM)),                            # W2 (bf16)
                rep((1, HIDDEN_DIM)),                                     # b2
                rep((1, HIDDEN_DIM)),                                     # gamma2
                rep((1, HIDDEN_DIM)),                                     # beta2
            ],
            out_specs=pl.BlockSpec((batch_tile, HIDDEN_DIM), lambda i: (i, 0)),
        ),
        compiler_params=pltpu.CompilerParams(
            dimension_semantics=("parallel",)),
    )(x, w1c, b1, g1, be1, w2c, b2, g2, be2)


def init_params(key):
    k1, k2, k3, k4 = jax.random.split(key, 4)
    # PyTorch Linear default init: U(-1/sqrt(fan_in), 1/sqrt(fan_in))
    lim1 = 1.0 / jnp.sqrt(INPUT_DIM)
    lim2 = 1.0 / jnp.sqrt(HIDDEN_DIM)
    w1 = jax.random.uniform(k1, (INPUT_DIM, HIDDEN_DIM), jnp.float32, -lim1, lim1)
    b1 = jax.random.uniform(k2, (1, HIDDEN_DIM), jnp.float32, -lim1, lim1)
    w2 = jax.random.uniform(k3, (HIDDEN_DIM, HIDDEN_DIM), jnp.float32, -lim2, lim2)
    b2 = jax.random.uniform(k4, (1, HIDDEN_DIM), jnp.float32, -lim2, lim2)
    # LayerNorm: gamma=1, beta=0
    g1 = jnp.ones((1, HIDDEN_DIM), jnp.float32)
    be1 = jnp.zeros((1, HIDDEN_DIM), jnp.float32)
    g2 = jnp.ones((1, HIDDEN_DIM), jnp.float32)
    be2 = jnp.zeros((1, HIDDEN_DIM), jnp.float32)
    return (w1, b1, g1, be1, w2, b2, g2, be2)


def reference(x, params, *, bf16_matmul=True):
    """Pure-JAX reference mirroring the kernel's precision choices."""
    w1, b1, g1, be1, w2, b2, g2, be2 = params

    def dot(a, w):
        if bf16_matmul:
            a = a.astype(jnp.bfloat16)
            w = w.astype(jnp.bfloat16)
        return jnp.dot(a, w, preferred_element_type=jnp.float32)

    def ln(h, g, be):
        mu = jnp.mean(h, -1, keepdims=True)
        var = jnp.mean((h - mu) ** 2, -1, keepdims=True)
        return (h - mu) * jax.lax.rsqrt(var + LN_EPS) * g + be

    h = jnp.maximum(ln(dot(x, w1) + b1, g1, be1), 0.0)
    h = jnp.maximum(ln(dot(h, w2) + b2, g2, be2), 0.0)
    return h


if __name__ == "__main__":
    key = jax.random.PRNGKey(0)
    kx, kp = jax.random.split(key)
    params = init_params(kp)

    # Small case: one sublane-aligned tile.
    B = 8
    x = jax.random.normal(kx, (B, INPUT_DIM), dtype=jnp.float32)
    out = mlp_branch(x, params)                       # f32 output by default
    jax.block_until_ready(out)
    assert out.shape == (B, HIDDEN_DIM)

    # Tight check vs a reference mirroring the kernel algorithm (bf16 MXU, f32 acc).
    ref_mirror = reference(x, params, bf16_matmul=True)
    assert jnp.allclose(out, ref_mirror, atol=2e-3, rtol=2e-3), "mismatch vs mirrored reference"
    # Loose check vs the pure-f32 reference (bf16 operand rounding only).
    ref_f32 = reference(x, params, bf16_matmul=False)
    assert jnp.allclose(out, ref_f32, atol=1e-1, rtol=1e-1), "mismatch vs f32 reference"

    # bf16 output path (halves the dominant HBM store traffic).
    out_bf16 = mlp_branch(x, params, out_dtype=jnp.bfloat16)
    jax.block_until_ready(out_bf16)
    assert out_bf16.dtype == jnp.bfloat16

    # Partial trailing block, no wrapper pad/slice: B=300, tile=128 -> grid of 3.
    B2 = 300
    x2 = jax.random.normal(kx, (B2, INPUT_DIM), dtype=jnp.float32)
    out2 = mlp_branch(x2, params, batch_tile=128)
    jax.block_until_ready(out2)
    assert out2.shape == (B2, HIDDEN_DIM)
    assert jnp.allclose(out2, reference(x2, params, bf16_matmul=True),
                        atol=2e-3, rtol=2e-3), "mismatch on partial-block path"

    # Default tile selection for a mid-size batch: grid of 2 (v7x TC sharding),
    # second block partial.
    B3 = 600
    x3 = jax.random.normal(kx, (B3, INPUT_DIM), dtype=jnp.float32)
    out3 = mlp_branch(x3, params)
    jax.block_until_ready(out3)
    assert out3.shape == (B3, HIDDEN_DIM)
    assert jnp.allclose(out3, reference(x3, params, bf16_matmul=True),
                        atol=2e-3, rtol=2e-3), "mismatch on default mid-size path"

    print("KERNEL_OK")
</pallas_src>

<mosaic_0001>
module attributes {stable_mosaic.version = 11 : i64} {
  func.func @mlp_branch_kernel(%arg0: i32, %arg1: memref<8x20xf32, #tpu.memory_space<vmem>>, %arg2: memref<20x128xbf16, #tpu.memory_space<vmem>>, %arg3: memref<1x128xf32, #tpu.memory_space<vmem>>, %arg4: memref<1x128xf32, #tpu.memory_space<vmem>>, %arg5: memref<1x128xf32, #tpu.memory_space<vmem>>, %arg6: memref<128x128xbf16, #tpu.memory_space<vmem>>, %arg7: memref<1x128xf32, #tpu.memory_space<vmem>>, %arg8: memref<1x128xf32, #tpu.memory_space<vmem>>, %arg9: memref<1x128xf32, #tpu.memory_space<vmem>>, %arg10: memref<8x128xf32, #tpu.memory_space<vmem>>) attributes {dimension_semantics = [#tpu.dimension_semantics<parallel>], iteration_bounds = array<i64: 1>, scalar_prefetch = 0 : i64, scratch_operands = 0 : i64, tpu.core_type = #tpu.core_type<tc>, window_params = [{transform_indices = @transform_0, window_bounds = array<i64: 8, 20>}, {pipeline_mode = #tpu.pipeline_mode<synchronous>, transform_indices = @transform_1, window_bounds = array<i64: 20, 128>}, {pipeline_mode = #tpu.pipeline_mode<synchronous>, transform_indices = @transform_2, window_bounds = array<i64: 1, 128>}, {pipeline_mode = #tpu.pipeline_mode<synchronous>, transform_indices = @transform_3, window_bounds = array<i64: 1, 128>}, {pipeline_mode = #tpu.pipeline_mode<synchronous>, transform_indices = @transform_4, window_bounds = array<i64: 1, 128>}, {pipeline_mode = #tpu.pipeline_mode<synchronous>, transform_indices = @transform_5, window_bounds = array<i64: 128, 128>}, {pipeline_mode = #tpu.pipeline_mode<synchronous>, transform_indices = @transform_6, window_bounds = array<i64: 1, 128>}, {pipeline_mode = #tpu.pipeline_mode<synchronous>, transform_indices = @transform_7, window_bounds = array<i64: 1, 128>}, {pipeline_mode = #tpu.pipeline_mode<synchronous>, transform_indices = @transform_8, window_bounds = array<i64: 1, 128>}, {transform_indices = @transform_9, window_bounds = array<i64: 8, 128>}]} {
    %c0 = arith.constant 0 : index
    %c0_0 = arith.constant 0 : index
    %0 = vector.load %arg1[%c0, %c0_0] : memref<8x20xf32, #tpu.memory_space<vmem>>, vector<8x20xf32>
    %1 = arith.truncf %0 : vector<8x20xf32> to vector<8x20xbf16>
    %c0_1 = arith.constant 0 : index
    %c0_2 = arith.constant 0 : index
    %2 = vector.load %arg2[%c0_1, %c0_2] : memref<20x128xbf16, #tpu.memory_space<vmem>>, vector<20x128xbf16>
    %cst = arith.constant dense<0.000000e+00> : vector<8x128xf32>
    %3 = tpu.matmul %1, %2, %cst {dimension_numbers = #tpu.dot_dimension_numbers<[1], [0], [0], [1], [0, 0, 1, 1], [], []>} : vector<8x20xbf16>, vector<20x128xbf16>, vector<8x128xf32> -> vector<8x128xf32>
    %c0_3 = arith.constant 0 : index
    %c0_4 = arith.constant 0 : index
    %4 = vector.load %arg3[%c0_3, %c0_4] : memref<1x128xf32, #tpu.memory_space<vmem>>, vector<1x128xf32>
    %5 = vector.broadcast %4 : vector<1x128xf32> to vector<8x128xf32>
    %6 = arith.addf %3, %5 : vector<8x128xf32>
    %c0_5 = arith.constant 0 : index
    %c0_6 = arith.constant 0 : index
    %7 = vector.load %arg4[%c0_5, %c0_6] : memref<1x128xf32, #tpu.memory_space<vmem>>, vector<1x128xf32>
    %c0_7 = arith.constant 0 : index
    %c0_8 = arith.constant 0 : index
    %8 = vector.load %arg5[%c0_7, %c0_8] : memref<1x128xf32, #tpu.memory_space<vmem>>, vector<1x128xf32>
    %cst_9 = arith.constant dense<0.000000e+00> : vector<8xf32>
    %9 = vector.multi_reduction <add>, %6, %cst_9 [1] : vector<8x128xf32> to vector<8xf32>
    %10 = vector.shape_cast %9 : vector<8xf32> to vector<8x1xf32>
    %11 = arith.mulf %6, %6 : vector<8x128xf32>
    %cst_10 = arith.constant dense<0.000000e+00> : vector<8xf32>
    %12 = vector.multi_reduction <add>, %11, %cst_10 [1] : vector<8x128xf32> to vector<8xf32>
    %13 = vector.shape_cast %12 : vector<8xf32> to vector<8x1xf32>
    %cst_11 = arith.constant 7.812500e-03 : f32
    %14 = vector.broadcast %cst_11 : f32 to vector<8x1xf32>
    %15 = arith.mulf %10, %14 : vector<8x1xf32>
    %cst_12 = arith.constant 7.812500e-03 : f32
    %16 = vector.broadcast %cst_12 : f32 to vector<8x1xf32>
    %17 = arith.mulf %13, %16 : vector<8x1xf32>
    %18 = arith.mulf %15, %15 : vector<8x1xf32>
    %19 = arith.subf %17, %18 : vector<8x1xf32>
    %cst_13 = arith.constant 0.000000e+00 : f32
    %20 = vector.broadcast %cst_13 : f32 to vector<8x1xf32>
    %21 = arith.maximumf %19, %20 : vector<8x1xf32>
    %22 = vector.broadcast %15 : vector<8x1xf32> to vector<8x128xf32>
    %23 = arith.subf %6, %22 : vector<8x128xf32>
    %cst_14 = arith.constant 9.99999974E-6 : f32
    %24 = vector.broadcast %cst_14 : f32 to vector<8x1xf32>
    %25 = arith.addf %21, %24 : vector<8x1xf32>
    %26 = math.rsqrt %25 : vector<8x1xf32>
    %27 = vector.broadcast %26 : vector<8x1xf32> to vector<8x128xf32>
    %28 = arith.mulf %23, %27 : vector<8x128xf32>
    %29 = vector.broadcast %7 : vector<1x128xf32> to vector<8x128xf32>
    %30 = arith.mulf %28, %29 : vector<8x128xf32>
    %31 = vector.broadcast %8 : vector<1x128xf32> to vector<8x128xf32>
    %32 = arith.addf %30, %31 : vector<8x128xf32>
    %cst_15 = arith.constant 0.000000e+00 : f32
    %33 = vector.broadcast %cst_15 : f32 to vector<8x128xf32>
    %34 = arith.maximumf %32, %33 : vector<8x128xf32>
    %35 = arith.truncf %34 : vector<8x128xf32> to vector<8x128xbf16>
    %c0_16 = arith.constant 0 : index
    %c0_17 = arith.constant 0 : index
    %36 = vector.load %arg6[%c0_16, %c0_17] : memref<128x128xbf16, #tpu.memory_space<vmem>>, vector<128x128xbf16>
    %cst_18 = arith.constant dense<0.000000e+00> : vector<8x128xf32>
    %37 = tpu.matmul %35, %36, %cst_18 {dimension_numbers = #tpu.dot_dimension_numbers<[1], [0], [0], [1], [0, 0, 1, 1], [], []>} : vector<8x128xbf16>, vector<128x128xbf16>, vector<8x128xf32> -> vector<8x128xf32>
    %c0_19 = arith.constant 0 : index
    %c0_20 = arith.constant 0 : index
    %38 = vector.load %arg7[%c0_19, %c0_20] : memref<1x128xf32, #tpu.memory_space<vmem>>, vector<1x128xf32>
    %39 = vector.broadcast %38 : vector<1x128xf32> to vector<8x128xf32>
    %40 = arith.addf %37, %39 : vector<8x128xf32>
    %c0_21 = arith.constant 0 : index
    %c0_22 = arith.constant 0 : index
    %41 = vector.load %arg8[%c0_21, %c0_22] : memref<1x128xf32, #tpu.memory_space<vmem>>, vector<1x128xf32>
    %c0_23 = arith.constant 0 : index
    %c0_24 = arith.constant 0 : index
    %42 = vector.load %arg9[%c0_23, %c0_24] : memref<1x128xf32, #tpu.memory_space<vmem>>, vector<1x128xf32>
    %cst_25 = arith.constant dense<0.000000e+00> : vector<8xf32>
    %43 = vector.multi_reduction <add>, %40, %cst_25 [1] : vector<8x128xf32> to vector<8xf32>
    %44 = vector.shape_cast %43 : vector<8xf32> to vector<8x1xf32>
    %45 = arith.mulf %40, %40 : vector<8x128xf32>
    %cst_26 = arith.constant dense<0.000000e+00> : vector<8xf32>
    %46 = vector.multi_reduction <add>, %45, %cst_26 [1] : vector<8x128xf32> to vector<8xf32>
    %47 = vector.shape_cast %46 : vector<8xf32> to vector<8x1xf32>
    %cst_27 = arith.constant 7.812500e-03 : f32
    %48 = vector.broadcast %cst_27 : f32 to vector<8x1xf32>
    %49 = arith.mulf %44, %48 : vector<8x1xf32>
    %cst_28 = arith.constant 7.812500e-03 : f32
    %50 = vector.broadcast %cst_28 : f32 to vector<8x1xf32>
    %51 = arith.mulf %47, %50 : vector<8x1xf32>
    %52 = arith.mulf %49, %49 : vector<8x1xf32>
    %53 = arith.subf %51, %52 : vector<8x1xf32>
    %cst_29 = arith.constant 0.000000e+00 : f32
    %54 = vector.broadcast %cst_29 : f32 to vector<8x1xf32>
    %55 = arith.maximumf %53, %54 : vector<8x1xf32>
    %56 = vector.broadcast %49 : vector<8x1xf32> to vector<8x128xf32>
    %57 = arith.subf %40, %56 : vector<8x128xf32>
    %cst_30 = arith.constant 9.99999974E-6 : f32
    %58 = vector.broadcast %cst_30 : f32 to vector<8x1xf32>
    %59 = arith.addf %55, %58 : vector<8x1xf32>
    %60 = math.rsqrt %59 : vector<8x1xf32>
    %61 = vector.broadcast %60 : vector<8x1xf32> to vector<8x128xf32>
    %62 = arith.mulf %57, %61 : vector<8x128xf32>
    %63 = vector.broadcast %41 : vector<1x128xf32> to vector<8x128xf32>
    %64 = arith.mulf %62, %63 : vector<8x128xf32>
    %65 = vector.broadcast %42 : vector<1x128xf32> to vector<8x128xf32>
    %66 = arith.addf %64, %65 : vector<8x128xf32>
    %cst_31 = arith.constant 0.000000e+00 : f32
    %67 = vector.broadcast %cst_31 : f32 to vector<8x128xf32>
    %68 = arith.maximumf %66, %67 : vector<8x128xf32>
    %c0_32 = arith.constant 0 : index
    %c0_33 = arith.constant 0 : index
    %69 = vector.load %arg10[%c0_32, %c0_33] : memref<8x128xf32, #tpu.memory_space<vmem>>, vector<8x128xf32>
    tpu.vector_store %arg10[%c0_32, %c0_33], %68 {strides = array<i32>} : memref<8x128xf32, #tpu.memory_space<vmem>>, vector<8x128xf32>,
    return
  }
  func.func @transform_0(%arg0: i32) -> (i32, i32) {
    %c0_i32 = arith.constant 0 : i32
    %c0_i32_0 = arith.constant 0 : i32
    return %arg0, %c0_i32 : i32, i32
  }
  func.func @transform_1(%arg0: i32) -> (i32, i32) {
    %c0_i32 = arith.constant 0 : i32
    %c0_i32_0 = arith.constant 0 : i32
    %c0_i32_1 = arith.constant 0 : i32
    return %c0_i32, %c0_i32_0 : i32, i32
  }
  func.func @transform_2(%arg0: i32) -> (i32, i32) {
    %c0_i32 = arith.constant 0 : i32
    %c0_i32_0 = arith.constant 0 : i32
    %c0_i32_1 = arith.constant 0 : i32
    return %c0_i32, %c0_i32_0 : i32, i32
  }
  func.func @transform_3(%arg0: i32) -> (i32, i32) {
    %c0_i32 = arith.constant 0 : i32
    %c0_i32_0 = arith.constant 0 : i32
    %c0_i32_1 = arith.constant 0 : i32
    return %c0_i32, %c0_i32_0 : i32, i32
  }
  func.func @transform_4(%arg0: i32) -> (i32, i32) {
    %c0_i32 = arith.constant 0 : i32
    %c0_i32_0 = arith.constant 0 : i32
    %c0_i32_1 = arith.constant 0 : i32
    return %c0_i32, %c0_i32_0 : i32, i32
  }
  func.func @transform_5(%arg0: i32) -> (i32, i32) {
    %c0_i32 = arith.constant 0 : i32
    %c0_i32_0 = arith.constant 0 : i32
    %c0_i32_1 = arith.constant 0 : i32
    return %c0_i32, %c0_i32_0 : i32, i32
  }
  func.func @transform_6(%arg0: i32) -> (i32, i32) {
    %c0_i32 = arith.constant 0 : i32
    %c0_i32_0 = arith.constant 0 : i32
    %c0_i32_1 = arith.constant 0 : i32
    return %c0_i32, %c0_i32_0 : i32, i32
  }
  func.func @transform_7(%arg0: i32) -> (i32, i32) {
    %c0_i32 = arith.constant 0 : i32
    %c0_i32_0 = arith.constant 0 : i32
    %c0_i32_1 = arith.constant 0 : i32
    return %c0_i32, %c0_i32_0 : i32, i32
  }
  func.func @transform_8(%arg0: i32) -> (i32, i32) {
    %c0_i32 = arith.constant 0 : i32
    %c0_i32_0 = arith.constant 0 : i32
    %c0_i32_1 = arith.constant 0 : i32
    return %c0_i32, %c0_i32_0 : i32, i32
  }
  func.func @transform_9(%arg0: i32) -> (i32, i32) {
    %c0_i32 = arith.constant 0 : i32
    %c0_i32_0 = arith.constant 0 : i32
    return %arg0, %c0_i32 : i32, i32
  }
}

</mosaic_0001>

<llo_original>
// kernel: tpu_custom_call.1
$region0: #{tpu_custom_call.1}
  #allocation0 [shape = 'u32[]', space=smem, size = 0x4, offset = 0x4, fixed_abs, tag = 'smem constant byte address 0x4 - core index']
  #allocation1 [shape = 'u32[144,128]{1,0:T(1,128)}', space=vmem, size = 0x12000, scoped, tag = 'internal scratch']
  %s0 = inlined_call_operand.hbm [shape: f32[8,20], index: 0, kind: input, shape index: {}]
  %s1 = inlined_call_operand.hbm [shape: bf16[20,128], index: 1, kind: input, shape index: {}]
  %s2 = inlined_call_operand.vmem [shape: f32[1,128], index: 2, kind: input, shape index: {}]
  %s3 = inlined_call_operand.vmem [shape: f32[1,128], index: 3, kind: input, shape index: {}]
  %s4 = inlined_call_operand.vmem [shape: f32[1,128], index: 4, kind: input, shape index: {}]
  %s5 = inlined_call_operand.hbm [shape: bf16[128,128], index: 5, kind: input, shape index: {}]
  %s6 = inlined_call_operand.vmem [shape: f32[1,128], index: 6, kind: input, shape index: {}]
  %s7 = inlined_call_operand.vmem [shape: f32[1,128], index: 7, kind: input, shape index: {}]
  %s8 = inlined_call_operand.vmem [shape: f32[1,128], index: 8, kind: input, shape index: {}]
  %s9 = inlined_call_operand.hbm [shape: f32[8,128], index: 9, kind: output, shape index: {}]
  %s10 = sld [smem:[#allocation0]]
  $region58: #{tpu_custom_call.1} parent=0
    _
  %s12 = ssub.s32 1, %s10
  %s13 = scalar_select 0, %s12, %s10
  $region1: #{tpu_custom_call.1} parent=0
    #allocation2 [shape = 'u8[4096]{0}', space=vmem, size = 0x1000, scoped, tag = 'input window, operand 0, single buffered']
    #allocation3 [shape = 's32[1]{0}', space=sflag, size = 0x4, scoped, tag = 'scoped memory for tpu_custom_call.1']
    #allocation4 [shape = 's32[1]{0}', space=sflag, size = 0x4, scoped, tag = 'scoped memory for tpu_custom_call.1']
    #allocation5 [shape = 'u8[6144]{0}', space=vmem, size = 0x1800, scoped, tag = 'input window, operand 1, single buffered']
    #allocation6 [shape = 's32[1]{0}', space=sflag, size = 0x4, scoped, tag = 'scoped memory for tpu_custom_call.1']
    #allocation7 [shape = 'u8[32768]{0}', space=vmem, size = 0x8000, scoped, tag = 'input window, operand 5, single buffered']
    #allocation8 [shape = 'u8[4096]{0}', space=vmem, size = 0x1000, scoped, tag = 'output window, operand 0, single buffered']
    %14 = vsyncpa [#allocation3], 0
    %15 = vsyncpa [#allocation6], 0
    %16 = vsyncpa [#allocation4], 0
    // Predicated region
    $region2: #{tpu_custom_call.1} parent=1 // pred_check
      _
    $region3: #{tpu_custom_call.1} parent=1 // pred_check_branch
      %18 = sbr.rel (0) target = $region5
    $region4: #{tpu_custom_call.1} parent=1 // pred_region
      %s20 = ssub.s32 128, 128
      %21 = vsyncadd [#allocation3], %s20
      %s23 = sshll.u32 [#allocation2], 4
      %s24 = int_to_ptr.vmem [resolvable:$true] %s23
      %26 = dma.hbm_to_vmem [thread:$0]  %s0, 128, %s24, [#allocation3]
    $region5: #{tpu_custom_call.1} parent=1 // pred_fallthru
      _
    // Predicated region
    $region6: #{tpu_custom_call.1} parent=1 // pred_check
      _
    $region7: #{tpu_custom_call.1} parent=1 // pred_check_branch
      %28 = sbr.rel (0) target = $region9
    $region8: #{tpu_custom_call.1} parent=1 // pred_region
      %s30 = ssub.s32 192, 192
      %31 = vsyncadd [#allocation6], %s30
      %s32 = sshll.u32 [#allocation5], 4
      %s33 = int_to_ptr.vmem [resolvable:$true] %s32
      %38 = dma.hbm_to_vmem [thread:$0]  %s1, 192, %s33, [#allocation6], 64, 64, 4
    $region9: #{tpu_custom_call.1} parent=1 // pred_fallthru
      _
    // Predicated region
    $region10: #{tpu_custom_call.1} parent=1 // pred_check
      _
    $region11: #{tpu_custom_call.1} parent=1 // pred_check_branch
      %40 = sbr.rel (0) target = $region13
    $region12: #{tpu_custom_call.1} parent=1 // pred_region
      _
    $region13: #{tpu_custom_call.1} parent=1 // pred_fallthru
      _
    // Predicated region
    $region14: #{tpu_custom_call.1} parent=1 // pred_check
      _
    $region15: #{tpu_custom_call.1} parent=1 // pred_check_branch
      %42 = sbr.rel (0) target = $region17
    $region16: #{tpu_custom_call.1} parent=1 // pred_region
      _
    $region17: #{tpu_custom_call.1} parent=1 // pred_fallthru
      _
    // Predicated region
    $region18: #{tpu_custom_call.1} parent=1 // pred_check
      _
    $region19: #{tpu_custom_call.1} parent=1 // pred_check_branch
      %44 = sbr.rel (0) target = $region21
    $region20: #{tpu_custom_call.1} parent=1 // pred_region
      _
    $region21: #{tpu_custom_call.1} parent=1 // pred_fallthru
      _
    // Predicated region
    $region22: #{tpu_custom_call.1} parent=1 // pred_check
      _
    $region23: #{tpu_custom_call.1} parent=1 // pred_check_branch
      %46 = sbr.rel (0) target = $region25
    $region24: #{tpu_custom_call.1} parent=1 // pred_region
      %s48 = ssub.s32 1024, 1024
      %49 = vsyncadd [#allocation6], %s48
      %s50 = sshll.u32 [#allocation7], 4
      %s51 = int_to_ptr.vmem [resolvable:$true] %s50
      %56 = dma.hbm_to_vmem [thread:$0]  %s5, 1024, %s51, [#allocation6], 64, 64, 4
    $region25: #{tpu_custom_call.1} parent=1 // pred_fallthru
      _
    // Predicated region
    $region26: #{tpu_custom_call.1} parent=1 // pred_check
      _
    $region27: #{tpu_custom_call.1} parent=1 // pred_check_branch
      %58 = sbr.rel (0) target = $region29
    $region28: #{tpu_custom_call.1} parent=1 // pred_region
      _
    $region29: #{tpu_custom_call.1} parent=1 // pred_fallthru
      _
    // Predicated region
    $region30: #{tpu_custom_call.1} parent=1 // pred_check
      _
    $region31: #{tpu_custom_call.1} parent=1 // pred_check_branch
      %60 = sbr.rel (0) target = $region33
    $region32: #{tpu_custom_call.1} parent=1 // pred_region
      _
    $region33: #{tpu_custom_call.1} parent=1 // pred_fallthru
      _
    // Predicated region
    $region34: #{tpu_custom_call.1} parent=1 // pred_check
      _
    $region35: #{tpu_custom_call.1} parent=1 // pred_check_branch
      %62 = sbr.rel (0) target = $region37
    $region36: #{tpu_custom_call.1} parent=1 // pred_region
      _
    $region37: #{tpu_custom_call.1} parent=1 // pred_fallthru
      _
    // Predicated region
    $region38: #{tpu_custom_call.1} parent=1 // pred_check
      _
    $region39: #{tpu_custom_call.1} parent=1 // pred_check_branch
      %64 = sbr.rel (0) target = $region41
    $region40: #{tpu_custom_call.1} parent=1 // pred_region
      %65 = dma.done [#allocation3], 128
    $region41: #{tpu_custom_call.1} parent=1 // pred_fallthru
      _
    // Predicated region
    $region42: #{tpu_custom_call.1} parent=1 // pred_check
      _
    $region43: #{tpu_custom_call.1} parent=1 // pred_check_branch
      %67 = sbr.rel (0) target = $region45
    $region44: #{tpu_custom_call.1} parent=1 // pred_region
      %68 = dma.done [#allocation6], 192
    $region45: #{tpu_custom_call.1} parent=1 // pred_fallthru
      _
    // Predicated region
    $region46: #{tpu_custom_call.1} parent=1 // pred_check
      _
    $region47: #{tpu_custom_call.1} parent=1 // pred_check_branch
      %70 = sbr.rel (0) target = $region49
    $region48: #{tpu_custom_call.1} parent=1 // pred_region
      %71 = dma.done [#allocation6], 1024
    $region49: #{tpu_custom_call.1} parent=1 // pred_fallthru
      _
    %v73 = vld [vmem:[#allocation2] sm:$0xff]
    %v74 = vpack.c.bf16 %v73, %v73
    %v75 = vld [vmem:[#allocation5] sm:$0xf]
    %v76 = vld [vmem:[#allocation5 + $0x4] sm:$0xf]
    %v77 = vld [vmem:[#allocation5 + $0x8] sm:$0x3]
    %v78 = vld [vmem:[%s2] sm:$0x1]
    %v80 = vlaneseq
    %v81 = vshrl.u32 %v80, 7
    %v82 = vsub.s32 0, %v81
    %v83 = vrot.slane %v78, %v82
    %v88 = vunpack.c.l.b16 %v75
    %v89 = vunpack.c.l.b16 %v76
    %v90 = vunpack.c.l.b16 %v77
    %v91 = vpack.c.b16 %v89, %v88
    %v92 = vpack.c.b16 %v90, %v90
    %vm94 = vcmask 162816
    %v96 = vsel %vm94, %v74, 0
    %vm98 = vcmask 1041408
    %v100 = vsel %vm98, %v92, 0
    %102 = vmatprep.subr.bf16.mxu0 0
    %103 = vmatpush1.bf16.msra.mxu0 %v91
    %104 = vmatprep.subr.bf16.mxu0 0
    %105 = vmatpush1.bf16.msra.mxu0 %v100
    %106 = vmatprep.subr.bf16.mxu0 0
    %107 = vmatpush1.bf16.msra.mxu0 0
    %108 = vmatprep.subr.bf16.mxu0 0
    %109 = vmatpush1.bf16.msra.mxu0 0
    %110 = vmatprep.subr.bf16.mxu0 0
    %111 = vmatpush1.bf16.msra.mxu0 0
    %112 = vmatprep.subr.bf16.mxu0 0
    %113 = vmatpush1.bf16.msra.mxu0 0
    %114 = vmatprep.subr.bf16.mxu0 0
    %115 = vmatpush1.bf16.msra.mxu0 0
    %116 = vmatprep.subr.bf16.mxu0 0
    %117 = vmatpush1.bf16.msra.mxu0 0
    %118 = vmatprep.subr.bf16.mxu0 0
    %119 = vmatpush1.bf16.msra.mxu0 0
    %120 = vmatprep.subr.bf16.mxu0 0
    %121 = vmatpush1.bf16.msra.mxu0 0
    %122 = vmatprep.subr.bf16.mxu0 0
    %123 = vmatpush1.bf16.msra.mxu0 0
    %124 = vmatprep.subr.bf16.mxu0 0
    %125 = vmatpush1.bf16.msra.mxu0 0
    %126 = vmatprep.subr.bf16.mxu0 0
    %127 = vmatpush1.bf16.msra.mxu0 0
    %128 = vmatprep.subr.bf16.mxu0 0
    %129 = vmatpush1.bf16.msra.mxu0 0
    %130 = vmatprep.subr.bf16.mxu0 0
    %131 = vmatpush1.bf16.msra.mxu0 0
    %132 = vmatprep.subr.bf16.mxu0 0
    %133 = vmatpush1.bf16.msra.mxu0 0
    %134 = vmatprep.mubr.bf16.mxu0 0
    %135 = vmatmul.mubr.bf16.gmra.mrb[0].mxu0 %v96
    %v136 = vpop.f32.mrb[0].mxu0
    %v137 = vadd.f32 %v83, %v136
    %v138 = vpop.f32.mrb[0].mxu0
    %v139 = vpop.f32.mrb[0].mxu0
    %v140 = vpop.f32.mrb[0].mxu0
    %141 = vdwg.mxu0
    %v142 = vld [vmem:[%s3] sm:$0x1]
    %v143 = vld [vmem:[%s4] sm:$0x1]
    %144 = vadd.xlane.f32.xlu0 %v137
    %v145 = vpop.xlane.xlu0 %144
    %v146 = vmul.f32 %v137, %v137
    %147 = vadd.xlane.f32.xlu0 %v146
    %v148 = vpop.xlane.xlu0 %147
    %v149 = vmul.f32 %v145, 0.0078125
    %v150 = vmul.f32 %v148, 0.0078125
    %v151 = vmul.f32 %v149, %v149
    %v152 = vsub.f32 %v150, %v151
    %v153 = vmax.f32 %v152, 0.0
    %v154 = vsub.f32 %v137, %v149
    %v155 = vadd.f32 %v153, 1e-05
    %v156 = vrsqrt.pop %v155
    %v157 = vmul.f32 %v154, %v156
    %v159 = vlaneseq
    %v160 = vshrl.u32 %v159, 7
    %v161 = vsub.s32 0, %v160
    %v162 = vrot.slane %v142, %v161
    %v164 = vmul.f32 %v157, %v162
    %v166 = vlaneseq
    %v167 = vshrl.u32 %v166, 7
    %v168 = vsub.s32 0, %v167
    %v169 = vrot.slane %v143, %v168
    %v171 = vadd.f32 %v164, %v169
    %v172 = vmax.f32 %v171, 0.0
    %v173 = vpack.c.bf16 %v172, %v172
    %v174 = vld [vmem:[#allocation7] sm:$0xf]
    %v175 = vld [vmem:[#allocation7 + $0x4] sm:$0xf]
    %v176 = vld [vmem:[#allocation7 + $0x8] sm:$0xf]
    %v177 = vld [vmem:[#allocation7 + $0xc] sm:$0xf]
    %v178 = vld [vmem:[#allocation7 + $0x10] sm:$0xf]
    %v179 = vld [vmem:[#allocation7 + $0x14] sm:$0xf]
    %v180 = vld [vmem:[#allocation7 + $0x18] sm:$0xf]
    %v181 = vld [vmem:[#allocation7 + $0x1c] sm:$0xf]
    %v182 = vld [vmem:[#allocation7 + $0x20] sm:$0xf]
    %v183 = vld [vmem:[#allocation7 + $0x24] sm:$0xf]
    %v184 = vld [vmem:[#allocation7 + $0x28] sm:$0xf]
    %v185 = vld [vmem:[#allocation7 + $0x2c] sm:$0xf]
    %v186 = vld [vmem:[#allocation7 + $0x30] sm:$0xf]
    %v187 = vld [vmem:[#allocation7 + $0x34] sm:$0xf]
    %v188 = vld [vmem:[#allocation7 + $0x38] sm:$0xf]
    %v189 = vld [vmem:[#allocation7 + $0x3c] sm:$0xf]
    %v190 = vld [vmem:[%s6] sm:$0x1]
    %v192 = vlaneseq
    %v193 = vshrl.u32 %v192, 7
    %v194 = vsub.s32 0, %v193
    %v195 = vrot.slane %v190, %v194
    %v213 = vunpack.c.l.b16 %v174
    %v214 = vunpack.c.l.b16 %v175
    %v215 = vunpack.c.l.b16 %v176
    %v216 = vunpack.c.l.b16 %v177
    %v217 = vunpack.c.l.b16 %v178
    %v218 = vunpack.c.l.b16 %v179
    %v219 = vunpack.c.l.b16 %v180
    %v220 = vunpack.c.l.b16 %v181
    %v221 = vunpack.c.l.b16 %v182
    %v222 = vunpack.c.l.b16 %v183
    %v223 = vunpack.c.l.b16 %v184
    %v224 = vunpack.c.l.b16 %v185
    %v225 = vunpack.c.l.b16 %v186
    %v226 = vunpack.c.l.b16 %v187
    %v227 = vunpack.c.l.b16 %v188
    %v228 = vunpack.c.l.b16 %v189
    %v229 = vpack.c.b16 %v214, %v213
    %v230 = vpack.c.b16 %v216, %v215
    %v231 = vpack.c.b16 %v218, %v217
    %v232 = vpack.c.b16 %v220, %v219
    %v233 = vpack.c.b16 %v222, %v221
    %v234 = vpack.c.b16 %v224, %v223
    %v235 = vpack.c.b16 %v226, %v225
    %v236 = vpack.c.b16 %v228, %v227
    %245 = vmatprep.subr.bf16.mxu0 0
    %246 = vmatpush1.bf16.msra.mxu0 %v229
    %247 = vmatprep.subr.bf16.mxu0 0
    %248 = vmatpush1.bf16.msra.mxu0 %v230
    %249 = vmatprep.subr.bf16.mxu0 0
    %250 = vmatpush1.bf16.msra.mxu0 %v231
    %251 = vmatprep.subr.bf16.mxu0 0
    %252 = vmatpush1.bf16.msra.mxu0 %v232
    %253 = vmatprep.subr.bf16.mxu0 0
    %254 = vmatpush1.bf16.msra.mxu0 %v233
    %255 = vmatprep.subr.bf16.mxu0 0
    %256 = vmatpush1.bf16.msra.mxu0 %v234
    %257 = vmatprep.subr.bf16.mxu0 0
    %258 = vmatpush1.bf16.msra.mxu0 %v235
    %259 = vmatprep.subr.bf16.mxu0 0
    %260 = vmatpush1.bf16.msra.mxu0 %v236
    %261 = vmatprep.subr.bf16.mxu0 0
    %262 = vmatpush1.bf16.msra.mxu0 0
    %263 = vmatprep.subr.bf16.mxu0 0
    %264 = vmatpush1.bf16.msra.mxu0 0
    %265 = vmatprep.subr.bf16.mxu0 0
    %266 = vmatpush1.bf16.msra.mxu0 0
    %267 = vmatprep.subr.bf16.mxu0 0
    %268 = vmatpush1.bf16.msra.mxu0 0
    %269 = vmatprep.subr.bf16.mxu0 0
    %270 = vmatpush1.bf16.msra.mxu0 0
    %271 = vmatprep.subr.bf16.mxu0 0
    %272 = vmatpush1.bf16.msra.mxu0 0
    %273 = vmatprep.subr.bf16.mxu0 0
    %274 = vmatpush1.bf16.msra.mxu0 0
    %275 = vmatprep.subr.bf16.mxu0 0
    %276 = vmatpush1.bf16.msra.mxu0 0
    %277 = vmatprep.mubr.bf16.mxu0 0
    %278 = vmatmul.mubr.bf16.gmra.mrb[0].mxu0 %v173
    %v279 = vpop.f32.mrb[0].mxu0
    %v280 = vadd.f32 %v195, %v279
    %v281 = vpop.f32.mrb[0].mxu0
    %v282 = vpop.f32.mrb[0].mxu0
    %v283 = vpop.f32.mrb[0].mxu0
    %284 = vdwg.mxu0
    %v285 = vld [vmem:[%s7] sm:$0x1]
    %v286 = vld [vmem:[%s8] sm:$0x1]
    %287 = vadd.xlane.f32.xlu0 %v280
    %v288 = vpop.xlane.xlu0 %287
    %v289 = vmul.f32 %v280, %v280
    %290 = vadd.xlane.f32.xlu0 %v289
    %v291 = vpop.xlane.xlu0 %290
    %v292 = vmul.f32 %v288, 0.0078125
    %v293 = vmul.f32 %v291, 0.0078125
    %v294 = vmul.f32 %v292, %v292
    %v295 = vsub.f32 %v293, %v294
    %v296 = vmax.f32 %v295, 0.0
    %v297 = vsub.f32 %v280, %v292
    %v298 = vadd.f32 %v296, 1e-05
    %v299 = vrsqrt.pop %v298
    %v300 = vmul.f32 %v297, %v299
    %v302 = vlaneseq
    %v303 = vshrl.u32 %v302, 7
    %v304 = vsub.s32 0, %v303
    %v305 = vrot.slane %v285, %v304
    %v307 = vmul.f32 %v300, %v305
    %v309 = vlaneseq
    %v310 = vshrl.u32 %v309, 7
    %v311 = vsub.s32 0, %v310
    %v312 = vrot.slane %v286, %v311
    %v314 = vadd.f32 %v307, %v312
    %v315 = vmax.f32 %v314, 0.0
    %316 = vst [vmem:[#allocation8] sm:$0xff] %v315
    // Predicated region
    $region50: #{tpu_custom_call.1} parent=1 // pred_check
      _
    $region51: #{tpu_custom_call.1} parent=1 // pred_check_branch
      %318 = sbr.rel (0) target = $region53
    $region52: #{tpu_custom_call.1} parent=1 // pred_region
      %s320 = ssub.s32 128, 128
      %321 = vsyncadd [#allocation4], %s320
      %s323 = sshll.u32 [#allocation8], 4
      %s324 = int_to_ptr.vmem [resolvable:$true] %s323
      %326 = dma.vmem_to_hbm [thread:$0]  %s324, 128, %s9, [#allocation4]
    $region53: #{tpu_custom_call.1} parent=1 // pred_fallthru
      _
    // Predicated region
    $region54: #{tpu_custom_call.1} parent=1 // pred_check
      _
    $region55: #{tpu_custom_call.1} parent=1 // pred_check_branch
      %328 = sbr.rel (0) target = $region57
    $region56: #{tpu_custom_call.1} parent=1 // pred_region
      %329 = dma.done [#allocation4], 128
    $region57: #{tpu_custom_call.1} parent=1 // pred_fallthru
      _
    %330 = vsyncpa [#allocation3], 1
    %331 = vsyncpa [#allocation6], 1
    %332 = vsyncpa [#allocation4], 1

</llo_original>
